<compile_context>
chip_gen: v7x
topology: tpu7x:2x2x1
jax: 0.10.0
libtpu: 0.0.40
codegen_flags: <defaults>
</compile_context>

<pallas_src>
import functools

import jax
import jax.numpy as jnp
from jax import lax
from jax.experimental import pallas as pl
from jax.experimental.pallas import tpu as pltpu


def _cdiv(a, b):
    return -(-a // b)


def _lrn_kernel(x_ref, o_ref, *, size, alpha, beta, k):
    # x_ref / o_ref: (1, C, T) blocks.
    x = x_ref[0]                          # (C, T)
    xf = x.astype(jnp.float32)
    C, T = xf.shape
    lo = size // 2                        # zero rows in front of the window
    hi = size - 1 - lo                    # zero rows behind

    sq = xf * xf

    # Windowed sum along the channel (sublane) axis, entirely in-register:
    # zero-pad via concatenation, then `size` static shifted-slice adds.
    if size == 1:
        s = sq
    else:
        parts = []
        if lo > 0:
            parts.append(jnp.zeros((lo, T), jnp.float32))
        parts.append(sq)
        if hi > 0:
            parts.append(jnp.zeros((hi, T), jnp.float32))
        sq_p = jnp.concatenate(parts, axis=0)         # (C + size - 1, T)
        s = sq_p[0:C, :]
        for d in range(1, size):
            s = s + sq_p[d:d + C, :]

    denom = jnp.float32(k) + jnp.float32(alpha / size) * s

    # Multiply by denom^-beta instead of dividing by denom^beta.
    if beta == 0.75:
        r = lax.rsqrt(denom)              # d^-0.5
        inv = r * jnp.sqrt(r)             # d^-0.75 (exact composition)
    elif beta == 0.5:
        inv = lax.rsqrt(denom)
    elif beta == 1.0:
        inv = pl.reciprocal(denom)        # exact
    else:
        inv = denom ** jnp.float32(-beta)

    o_ref[0] = (xf * inv).astype(o_ref.dtype)


def _vmem_limit_and_budget():
    """Returns (vmem_limit_bytes for the compiler, pipeline-buffer budget)."""
    phys = 64 * 1024 * 1024               # conservative default = v7x per-TC VMEM
    try:
        info = pltpu.get_tpu_info()
        phys = int(getattr(info, "vmem_capacity_bytes", phys))
    except Exception:
        pass
    limit = min(phys // 2, 64 * 1024 * 1024)    # ~32 MiB on v7x, 64 MiB on v5e/v6e
    budget = min(phys // 4, 32 * 1024 * 1024)   # double-buffered in+out tiles
    return limit, budget


def _pick_spatial_tile(hw, channels, itemsize, n_outer, budget_bytes,
                       max_tile=8192, target_steps=8):
    """Lane-tile size T: a multiple of 128 (or the full extent HW), sized so
    the double-buffered in+out pipeline buffers (2*2*C*T*itemsize) fit the
    per-chip budget, capped at max_tile, mildly reduced to give enough grid
    steps for pipelining / v7x dual-TC sharding."""
    per_lane = 4 * channels * itemsize          # 2 buffers x (in + out) per lane
    t = max(128, min(max_tile, budget_bytes // per_lane))
    t = (t // 128) * 128
    if hw <= t:
        t = hw
        # Whole extent fits; only split further if it stays 128-aligned and we
        # are starved for grid steps.
        if hw % 128 == 0:
            while (t > 128 and (t // 2) % 128 == 0
                   and n_outer * _cdiv(hw, t) < target_steps):
                t //= 2
        return t
    # Tiled path: T is a multiple of 128; the last block may be partial.
    while t > 128 and n_outer * _cdiv(hw, t) < target_steps:
        t = max(128, ((t // 2) // 128) * 128)
    return t


def local_response_norm(x_nchw, size, alpha=0.0001, beta=0.75, k=2.0):
    """x_nchw: (N, C, H, W). Returns same shape/dtype."""
    N, C, H, W = x_nchw.shape
    HW = H * W
    x = x_nchw.reshape(N, C, HW)          # keep HBM traffic in the input dtype

    vmem_limit, budget = _vmem_limit_and_budget()
    itemsize = jnp.dtype(x.dtype).itemsize
    T = _pick_spatial_tile(HW, C, itemsize, N, budget)
    grid = (N, _cdiv(HW, T))

    kernel = functools.partial(
        _lrn_kernel,
        size=int(size), alpha=float(alpha), beta=float(beta), k=float(k),
    )

    out = pl.pallas_call(
        kernel,
        out_shape=jax.ShapeDtypeStruct((N, C, HW), x.dtype),
        grid_spec=pltpu.PrefetchScalarGridSpec(
            num_scalar_prefetch=0,
            grid=grid,
            in_specs=[pl.BlockSpec((1, C, T), lambda n, t: (n, 0, t))],
            out_specs=pl.BlockSpec((1, C, T), lambda n, t: (n, 0, t)),
        ),
        compiler_params=pltpu.CompilerParams(
            dimension_semantics=("parallel", "parallel"),
            vmem_limit_bytes=vmem_limit,
        ),
    )(x)

    return out.reshape(N, C, H, W)


def _lrn_reference(x, size, alpha, beta, k):
    """Pure-JAX reference mirroring F.local_response_norm exactly."""
    N, C, H, W = x.shape
    xf = x.astype(jnp.float32)
    sq = xf * xf
    pad_lo = size // 2
    pad_hi = size - 1 - pad_lo
    sq_p = jnp.pad(sq, ((0, 0), (pad_lo, pad_hi), (0, 0), (0, 0)))
    s = sum(sq_p[:, i:i + C] for i in range(size))
    div = (k + (alpha / size) * s) ** beta
    return (xf / div).astype(x.dtype)


if __name__ == "__main__":
    # Module params (AlexNet defaults): size=5, alpha=1e-4, beta=0.75, k=2
    size, alpha, beta, k = 5, 0.0001, 0.75, 2.0

    key = jax.random.PRNGKey(0)

    # Primary small test: (N=2, C=4, H=16, W=16), f32.
    x = jax.random.normal(key, (2, 4, 16, 16), dtype=jnp.float32)
    out = jax.block_until_ready(local_response_norm(x, size, alpha, beta, k))
    ref = _lrn_reference(x, size, alpha, beta, k)
    assert out.shape == x.shape and out.dtype == x.dtype
    assert jnp.allclose(out, ref, atol=1e-5, rtol=1e-5), "mismatch vs reference"

    # Secondary robustness check: spatial extent not a multiple of 128.
    x2 = jax.random.normal(jax.random.PRNGKey(1), (1, 6, 10, 13), dtype=jnp.float32)
    out2 = jax.block_until_ready(local_response_norm(x2, size, alpha, beta, k))
    ref2 = _lrn_reference(x2, size, alpha, beta, k)
    assert jnp.allclose(out2, ref2, atol=1e-5, rtol=1e-5), "mismatch vs reference (odd HW)"

    print("KERNEL_OK")
</pallas_src>

<mosaic_0001>
module attributes {stable_mosaic.version = 11 : i64} {
  func.func @_lrn_kernel(%arg0: i32, %arg1: i32, %arg2: memref<1x4x128xf32, #tpu.memory_space<vmem>>, %arg3: memref<1x4x128xf32, #tpu.memory_space<vmem>>) attributes {dimension_semantics = [#tpu.dimension_semantics<parallel>, #tpu.dimension_semantics<parallel>], iteration_bounds = array<i64: 2, 2>, scalar_prefetch = 0 : i64, scratch_operands = 0 : i64, tpu.core_type = #tpu.core_type<tc>, window_params = [{transform_indices = @transform_0, window_bounds = array<i64: 1, 4, 128>}, {transform_indices = @transform_1, window_bounds = array<i64: 1, 4, 128>}]} {
    %c0 = arith.constant 0 : index
    %c0_0 = arith.constant 0 : index
    %c0_1 = arith.constant 0 : index
    %0 = vector.load %arg2[%c0, %c0_0, %c0_1] : memref<1x4x128xf32, #tpu.memory_space<vmem>>, vector<1x4x128xf32>
    %1 = vector.shape_cast %0 : vector<1x4x128xf32> to vector<4x128xf32>
    %2 = arith.mulf %1, %1 : vector<4x128xf32>
    %cst = arith.constant 0.000000e+00 : f32
    %3 = vector.broadcast %cst : f32 to vector<2x128xf32>
    %cst_2 = arith.constant 0.000000e+00 : f32
    %4 = vector.broadcast %cst_2 : f32 to vector<2x128xf32>
    %5 = tpu.concatenate %3, %2, %4 in 0 : vector<2x128xf32>, vector<4x128xf32>, vector<2x128xf32> -> vector<8x128xf32>
    %6 = vector.extract_strided_slice %5 {offsets = [0, 0], sizes = [4, 128], strides = [1, 1]} : vector<8x128xf32> to vector<4x128xf32>
    %7 = vector.extract_strided_slice %5 {offsets = [1, 0], sizes = [4, 128], strides = [1, 1]} : vector<8x128xf32> to vector<4x128xf32>
    %8 = arith.addf %6, %7 : vector<4x128xf32>
    %9 = vector.extract_strided_slice %5 {offsets = [2, 0], sizes = [4, 128], strides = [1, 1]} : vector<8x128xf32> to vector<4x128xf32>
    %10 = arith.addf %8, %9 : vector<4x128xf32>
    %11 = vector.extract_strided_slice %5 {offsets = [3, 0], sizes = [4, 128], strides = [1, 1]} : vector<8x128xf32> to vector<4x128xf32>
    %12 = arith.addf %10, %11 : vector<4x128xf32>
    %13 = vector.extract_strided_slice %5 {offsets = [4, 0], sizes = [4, 128], strides = [1, 1]} : vector<8x128xf32> to vector<4x128xf32>
    %14 = arith.addf %12, %13 : vector<4x128xf32>
    %cst_3 = arith.constant 2.000000e-05 : f32
    %15 = vector.broadcast %cst_3 : f32 to vector<4x128xf32>
    %16 = arith.mulf %15, %14 : vector<4x128xf32>
    %cst_4 = arith.constant 2.000000e+00 : f32
    %17 = vector.broadcast %cst_4 : f32 to vector<4x128xf32>
    %18 = arith.addf %17, %16 : vector<4x128xf32>
    %19 = math.rsqrt %18 : vector<4x128xf32>
    %20 = math.sqrt %19 : vector<4x128xf32>
    %21 = arith.mulf %19, %20 : vector<4x128xf32>
    %22 = arith.mulf %1, %21 : vector<4x128xf32>
    %c0_5 = arith.constant 0 : index
    %c0_6 = arith.constant 0 : index
    %c0_7 = arith.constant 0 : index
    %23 = vector.load %arg3[%c0_5, %c0_6, %c0_7] : memref<1x4x128xf32, #tpu.memory_space<vmem>>, vector<1x4x128xf32>
    %24 = vector.shape_cast %23 : vector<1x4x128xf32> to vector<4x128xf32>
    %25 = vector.shape_cast %22 : vector<4x128xf32> to vector<1x4x128xf32>
    tpu.vector_store %arg3[%c0_5, %c0_6, %c0_7], %25 {strides = array<i32>} : memref<1x4x128xf32, #tpu.memory_space<vmem>>, vector<1x4x128xf32>,
    return
  }
  func.func @transform_0(%arg0: i32, %arg1: i32) -> (i32, i32, i32) {
    %c0_i32 = arith.constant 0 : i32
    %c0_i32_0 = arith.constant 0 : i32
    return %arg0, %c0_i32, %arg1 : i32, i32, i32
  }
  func.func @transform_1(%arg0: i32, %arg1: i32) -> (i32, i32, i32) {
    %c0_i32 = arith.constant 0 : i32
    %c0_i32_0 = arith.constant 0 : i32
    return %arg0, %c0_i32, %arg1 : i32, i32, i32
  }
}

</mosaic_0001>

<llo_original>
// kernel: tpu_custom_call.1
$region0: #{tpu_custom_call.1}
  #allocation0 [shape = 'u32[]', space=smem, size = 0x4, offset = 0x4, fixed_abs, tag = 'smem constant byte address 0x4 - core index']
  #allocation1 [shape = 'u32[144,128]{1,0:T(1,128)}', space=vmem, size = 0x12000, scoped, tag = 'internal scratch']
  %s0 = inlined_call_operand.hbm [shape: f32[2,4,256], index: 0, kind: input, shape index: {}]
  %s1 = inlined_call_operand.hbm [shape: f32[2,4,256], index: 1, kind: output, shape index: {}]
  %s2 = sld [smem:[#allocation0]]
  $region41: #{tpu_custom_call.1} parent=0
    _
  %s4 = ssub.s32 1, %s2
  %s5 = scalar_select 0, %s4, %s2
  $region1: #{tpu_custom_call.1} parent=0
    #allocation2 [shape = 'u8[4096]{0}', space=vmem, size = 0x1000, scoped, tag = 'input window, operand 0']
    #allocation3 [shape = 's32[2]{0}', space=sflag, size = 0x8, scoped, tag = 'scoped memory for tpu_custom_call.1']
    #allocation4 [shape = 's32[2]{0}', space=sflag, size = 0x8, scoped, tag = 'scoped memory for tpu_custom_call.1']
    #allocation5 [shape = 'u8[4096]{0}', space=vmem, size = 0x1000, scoped, tag = 'output window, operand 0']
    %6 = vsyncpa [#allocation3], 0
    %s7 = scalar_lea.sflag [#allocation3], 1
    %8 = vsyncpa %s7, 0
    %9 = vsyncpa [#allocation4], 0
    %s10 = scalar_lea.sflag [#allocation4], 1
    %11 = vsyncpa %s10, 0
    loop: start=0, step=1, limit=6
    $region2: #{tpu_custom_call.1} parent=1 // loop_pre_header
      _
    $region3: #{tpu_custom_call.1} parent=1 // loop_header
      %s13 = sphi 0, %s17
      %p14 = scmp.ge.s32.totalorder %s13, 6
      %s20 = sphi 0, %s32
      %s21 = sphi 0, %s28
      %s22 = sphi 0, %s20
      %s23 = sphi 0, %s21
      %s24 = sphi 0, %s22
      %s25 = sphi 0, %s23
      %s37 = sphi 0, %s39
      %s40 = sphi 0, %s37
      %s41 = sphi 0, %s40
      %s57 = sphi 0, %s41
      %s65 = sphi 0, %s67
      %s68 = sphi 0, %s65
      %s69 = sphi 0, %s68
      %s85 = sphi 0, %s69
    $region4: #{tpu_custom_call.1} parent=1 // loop_header_branch
      %16 = sbr.rel (%p14) target = $region8
    $region5: #{tpu_custom_call.1} parent=1 // loop_body
      %s18 = ssub.s32 %s13, 1
      %s19 = ssub.s32 %s13, 2
      %s26 = sadd.s32 1, %s21
      %p27 = scmp.ge.s32.totalorder %s26, 2
      %s28 = scalar_select %p27, 0, %s26
      %s29 = sadd.s32 1, %s20
      %s30 = scalar_select %p27, %s29, %s20
      %p31 = scmp.ge.s32.totalorder %s30, 2
      %s32 = scalar_select %p31, 0, %s30
      %s33 = ssub.s32 %s20, %s32
      %s34 = ssub.s32 %s21, %s28
      %s35 = sor.u32 %s33, %s34
      %p36 = scmp.eq.s32.totalorder %s35, 0
      %s38 = sadd.s32 %s37, 1
      %s39 = scalar_select %p36, %s37, %s38
      %p42 = pneg %p36
      %p43 = scmp.eq.s32.totalorder %s13, 3
      %p44 = por %p42, %p43
      %p45 = scmp.ne.s32.totalorder %s37, %s40
      %p46 = scmp.eq.s32.totalorder %s13, 0
      %p47 = por %p45, %p46
      %p48 = scmp.ne.s32.totalorder %s37, %s40
      %p49 = scmp.eq.s32.totalorder %s18, 3
      %p50 = por %p48, %p49
      %p51 = scmp.ne.s32.totalorder %s40, %s41
      %p52 = scmp.eq.s32.totalorder %s18, 0
      %p53 = por %p51, %p52
      %p54 = scmp.ne.s32.totalorder %s40, %s41
      %p55 = scmp.eq.s32.totalorder %s19, 3
      %p56 = por %p54, %p55
      %p58 = scmp.ne.s32.totalorder %s41, %s57
      %p59 = scmp.eq.s32.totalorder %s19, 0
      %p60 = por %p58, %p59
      %s61 = ssub.s32 %s20, %s32
      %s62 = ssub.s32 %s21, %s28
      %s63 = sor.u32 %s61, %s62
      %p64 = scmp.eq.s32.totalorder %s63, 0
      %s66 = sadd.s32 %s65, 1
      %s67 = scalar_select %p64, %s65, %s66
      %p70 = pneg %p64
      %p71 = scmp.eq.s32.totalorder %s13, 3
      %p72 = por %p70, %p71
      %p73 = scmp.ne.s32.totalorder %s65, %s68
      %p74 = scmp.eq.s32.totalorder %s13, 0
      %p75 = por %p73, %p74
      %p76 = scmp.ne.s32.totalorder %s65, %s68
      %p77 = scmp.eq.s32.totalorder %s18, 3
      %p78 = por %p76, %p77
      %p79 = scmp.ne.s32.totalorder %s68, %s69
      %p80 = scmp.eq.s32.totalorder %s18, 0
      %p81 = por %p79, %p80
      %p82 = scmp.ne.s32.totalorder %s68, %s69
      %p83 = scmp.eq.s32.totalorder %s19, 3
      %p84 = por %p82, %p83
      %p86 = scmp.ne.s32.totalorder %s69, %s85
      %p87 = scmp.eq.s32.totalorder %s19, 0
      %p88 = por %p86, %p87
      %p89 = scmp.le.s32.totalorder 1, %s13
      %p90 = scmp.lt.s32.totalorder %s13, 5
      %p91 = pnand %p89, %p90
      %p92 = pneg %p91
      // Predicated region
      $region9: #{tpu_custom_call.1} parent=5 // pred_check
        _
      $region10: #{tpu_custom_call.1} parent=5 // pred_check_branch
        %94 = sbr.rel (%p91) target = $region12
      $region11: #{tpu_custom_call.1} parent=5 // pred_region
        %s95 = ssub.s32 %s13, 1
      $region12: #{tpu_custom_call.1} parent=5 // pred_fallthru
        _
      %p96 = scmp.lt.s32.totalorder %s13, 4
      // Predicated region
      $region13: #{tpu_custom_call.1} parent=5 // pred_check
        %p97 = pneg %p96
      $region14: #{tpu_custom_call.1} parent=5 // pred_check_branch
        %99 = sbr.rel (%p97) target = $region16
      $region15: #{tpu_custom_call.1} parent=5 // pred_region
        // Predicated region
        $region17: #{tpu_custom_call.1} parent=15 // pred_check
          %p100 = pneg %p47
        $region18: #{tpu_custom_call.1} parent=15 // pred_check_branch
          %102 = sbr.rel (%p100) target = $region20
        $region19: #{tpu_custom_call.1} parent=15 // pred_region
          %s103 = sand.u32 %s37, 1
          %s104 = scalar_lea.sflag [#allocation3], %s103
          %s105 = sand.u32 %s37, 1
          %s106 = smul.addr %s105, 4
          %s107 = scalar_lea.vmem [#allocation2], %s106
          %s109 = ssub.s32 64, 64
          %110 = vsyncadd %s104, %s109
          %s111 = smul.addr %s20, 2
          %s112 = sadd.s32 %s21, %s111
          %s113 = smul.addr %s112, 64
          %s114 = scalar_lea.hbm %s0, %s113
          %s116 = sshll.u32 %s107, 4
          %s117 = int_to_ptr.vmem [resolvable:$true] %s116
          %119 = dma.hbm_to_vmem [thread:$0]  %s114, 64, %s117, %s104
        $region20: #{tpu_custom_call.1} parent=15 // pred_fallthru
          _
      $region16: #{tpu_custom_call.1} parent=5 // pred_fallthru
        _
      %p120 = scmp.le.s32.totalorder 1, %s13
      %p121 = scmp.lt.s32.totalorder %s13, 5
      %p122 = pnand %p120, %p121
      %p123 = pneg %p122
      // Predicated region
      $region21: #{tpu_custom_call.1} parent=5 // pred_check
        _
      $region22: #{tpu_custom_call.1} parent=5 // pred_check_branch
        %125 = sbr.rel (%p122) target = $region24
      $region23: #{tpu_custom_call.1} parent=5 // pred_region
        %s126 = ssub.s32 %s13, 1
        %s127 = sand.u32 %s40, 1
        %s128 = scalar_lea.sflag [#allocation3], %s127
        %s129 = sand.u32 %s40, 1
        %s130 = smul.addr %s129, 4
        %s131 = scalar_lea.vmem [#allocation2], %s130
        // Predicated region
        $region25: #{tpu_custom_call.1} parent=23 // pred_check
          %p132 = pneg %p53
        $region26: #{tpu_custom_call.1} parent=23 // pred_check_branch
          %134 = sbr.rel (%p132) target = $region28
        $region27: #{tpu_custom_call.1} parent=23 // pred_region
          %135 = dma.done %s128, 64
        $region28: #{tpu_custom_call.1} parent=23 // pred_fallthru
          _
        %s136 = sand.u32 %s40, 1
        %s137 = scalar_lea.sflag [#allocation3], %s136
        %s138 = sand.u32 %s40, 1
        %s139 = smul.addr %s138, 4
        %s140 = scalar_lea.vmem [#allocation2], %s139
        %p141 = pneg %p53
        %p142 = pneg %p50
        %p143 = pneg %p81
        %p144 = pneg %p78
        %s145 = sand.u32 %s68, 1
        %s146 = scalar_lea.sflag [#allocation4], %s145
        %s147 = sand.u32 %s68, 1
        %s148 = smul.addr %s147, 4
        %s149 = scalar_lea.vmem [#allocation5], %s148
        %v150 = vld [vmem:[%s131] sm:$0xf]
        %v151 = vmul.f32 %v150, %v150
        %v153 = vrot.slane %v151, 6
        %vm155 = vcmask 1041408
        %v156 = vsel %vm155, 0.0, %v153
        %vm157 = vcmask 1045504
        %v158 = vsel %vm157, %v156, 0.0
        %v160 = vrot.slane %v158, 1
        %v162 = vadd.f32 %v158, %v160
        %v163 = vrot.slane %v158, 2
        %v165 = vadd.f32 %v162, %v163
        %v166 = vrot.slane %v158, 3
        %v168 = vadd.f32 %v165, %v166
        %v169 = vrot.slane %v158, 4
        %v171 = vadd.f32 %v168, %v169
        %v172 = vmul.f32 %v171, 2e-05
        %v173 = vadd.f32 %v172, 2.0
        %v174 = vrsqrt.pop %v173
        %v175 = vrsqrt.pop %v174
        %v176 = vmul.f32 %v174, %v175
        %vm177 = vcmp.eq.f32.partialorder %v174, inf
        %v178 = vsel %vm177, %v174, %v176
        %vm179 = vcmp.eq.f32.partialorder %v174, 0.0
        %v180 = vand.u32 %v174, 2147483648
        %v181 = vsel %vm179, %v180, %v178
        %v182 = vmul.f32 %v174, %v181
        %v183 = vmul.f32 %v150, %v182
        %184 = vst [vmem:[%s149] sm:$0xf] %v183
        %s185 = sand.u32 %s68, 1
        %s186 = scalar_lea.sflag [#allocation4], %s185
        %s187 = sand.u32 %s68, 1
        %s188 = smul.addr %s187, 4
        %s189 = scalar_lea.vmem [#allocation5], %s188
        // Predicated region
        $region29: #{tpu_custom_call.1} parent=23 // pred_check
          %p190 = pneg %p78
        $region30: #{tpu_custom_call.1} parent=23 // pred_check_branch
          %192 = sbr.rel (%p190) target = $region32
        $region31: #{tpu_custom_call.1} parent=23 // pred_region
          %s194 = ssub.s32 64, 64
          %195 = vsyncadd %s186, %s194
          %s196 = smul.addr %s22, 2
          %s197 = sadd.s32 %s23, %s196
          %s198 = smul.addr %s197, 64
          %s199 = scalar_lea.hbm %s1, %s198
          %s201 = sshll.u32 %s189, 4
          %s202 = int_to_ptr.vmem [resolvable:$true] %s201
          %204 = dma.vmem_to_hbm [thread:$0]  %s202, 64, %s199, %s186
        $region32: #{tpu_custom_call.1} parent=23 // pred_fallthru
          _
      $region24: #{tpu_custom_call.1} parent=5 // pred_fallthru
        _
      %p205 = scmp.le.s32.totalorder 2, %s13
      // Predicated region
      $region33: #{tpu_custom_call.1} parent=5 // pred_check
        %p206 = pneg %p205
      $region34: #{tpu_custom_call.1} parent=5 // pred_check_branch
        %208 = sbr.rel (%p206) target = $region36
      $region35: #{tpu_custom_call.1} parent=5 // pred_region
        %s209 = ssub.s32 %s13, 2
        // Predicated region
        $region37: #{tpu_custom_call.1} parent=35 // pred_check
          %p210 = pneg %p84
        $region38: #{tpu_custom_call.1} parent=35 // pred_check_branch
          %212 = sbr.rel (%p210) target = $region40
        $region39: #{tpu_custom_call.1} parent=35 // pred_region
          %s213 = sand.u32 %s69, 1
          %s214 = scalar_lea.sflag [#allocation4], %s213
          %s215 = sand.u32 %s69, 1
          %s216 = smul.addr %s215, 4
          %s217 = scalar_lea.vmem [#allocation5], %s216
          %218 = dma.done %s214, 64
        $region40: #{tpu_custom_call.1} parent=35 // pred_fallthru
          _
      $region36: #{tpu_custom_call.1} parent=5 // pred_fallthru
        _
    $region6: #{tpu_custom_call.1} parent=1 // loop_footer
      %s17 = sadd.s32 1, %s13
    $region7: #{tpu_custom_call.1} parent=1 // loop_footer_branch
      %12 = sbr.rel target = $region3
    $region8: #{tpu_custom_call.1} parent=1 // loop_exit
      _
    %219 = vsyncpa [#allocation3], 1
    %s220 = scalar_lea.sflag [#allocation3], 1
    %221 = vsyncpa %s220, 1
    %222 = vsyncpa [#allocation4], 1
    %s223 = scalar_lea.sflag [#allocation4], 1
    %224 = vsyncpa %s223, 1

</llo_original>
